<compile_context>
chip_gen: v5e
topology: v5e:2x2
jax: 0.10.0
libtpu: 0.0.40
codegen_flags: <defaults>
</compile_context>

<pallas_src>
import functools
import math

import jax
import jax.numpy as jnp
from jax.experimental import pallas as pl
from jax.experimental.pallas import tpu as pltpu

LANE = 128


def _round_up(n, m):
    return ((n + m - 1) // m) * m


def _largest_divisor(n, candidates):
    for c in candidates:
        if c <= n and n % c == 0:
            return c
    return n


# ---------------------------------------------------------------------------
# Chip configuration (tile sizes / VMEM limits)
# ---------------------------------------------------------------------------

def _chip_config():
    kind = ''
    try:
        kind = jax.devices()[0].device_kind.lower()
    except Exception:
        pass
    vmem_cap = None
    try:
        vmem_cap = int(pltpu.get_tpu_info().vmem_capacity_bytes)
    except Exception:
        vmem_cap = None
    if vmem_cap is None:
        if '7' in kind:
            vmem_cap = 64 << 20
        elif ('v6' in kind) or ('v5' in kind) or ('v4' in kind):
            vmem_cap = 128 << 20
        else:
            vmem_cap = 64 << 20
    is_v5e = ('v5 lite' in kind) or ('v5e' in kind) or ('v5lite' in kind)
    wide_mxu = ('v6' in kind) or ('7' in kind)
    tm = 256 if (wide_mxu and not is_v5e) else 128
    vmem_limit = max(32 << 20, min(int(vmem_cap * 0.75), 96 << 20))
    budget = max(16 << 20, vmem_limit - (8 << 20))
    return {'tm': tm, 'vmem_limit': int(vmem_limit), 'budget': int(budget)}


# ---------------------------------------------------------------------------
# Pallas kernels
# ---------------------------------------------------------------------------

def _fused_quant_matmul_kernel(s_ref, a_ref, w_ref, y_ref, amax_ref, *,
                               half, quantize_input, mxu_dtype):
    """[optionally quantize the activation tile to codes] -> MXU matmul of
    codes x codes -> raw f32 result + per-tile |y| column max (broadcast to 8
    sublanes so the aux output block stays (8, 128)-aligned)."""
    w = w_ref[...]
    if quantize_input:
        inv = s_ref[0]                       # 1 / activation_scale
        codes = jnp.clip(jnp.round(a_ref[...].astype(jnp.float32) * inv),
                         -half, half)
        codes = codes.astype(mxu_dtype)
    else:
        codes = a_ref[...]                   # already integer codes
    if codes.dtype != w.dtype:
        codes = codes.astype(jnp.float32)
        w = w.astype(jnp.float32)
    y = jnp.dot(codes, w, preferred_element_type=jnp.float32)
    y_ref[...] = y
    cm = jnp.max(jnp.abs(y), axis=0, keepdims=True)           # (1, tn)
    amax_ref[...] = jnp.broadcast_to(cm, amax_ref.shape)      # (8, tn)


def _requant_kernel(r_ref, y_ref, o_ref, *, half, relu):
    """Re-quantize raw matmul codes with the folded scale; optional ReLU."""
    r = r_ref[0]
    q = jnp.clip(jnp.round(y_ref[...] * r), -half, half)
    if relu:
        q = jnp.maximum(q, 0.0)
    o_ref[...] = q.astype(o_ref.dtype)


def _requant_pool_kernel(r_ref, h0_ref, h1_ref, o_ref, *, half, relu, npad):
    """Fused 2x2/stride-2 max-pool + ReLU + re-quantization.
    h0/h1 are the even / odd image rows, each (tr, Wp, 2*Np) with the two
    W-taps packed on the lane axis -> all maxes are plain VPU ops."""
    r = r_ref[0]
    m = jnp.maximum(h0_ref[...], h1_ref[...])                 # H-pair max
    if relu:
        m = jnp.maximum(m, 0.0)
    m = jnp.maximum(m[:, :, :npad], m[:, :, npad:])           # W-pair max
    q = jnp.clip(jnp.round(m * r), -half, half)
    o_ref[...] = q.astype(o_ref.dtype)


def _relu_kernel(x_ref, o_ref):
    o_ref[...] = jnp.maximum(x_ref[...].astype(jnp.float32), 0.0).astype(
        o_ref.dtype)


def _maxpool_kernel(x_ref, o_ref):
    x = x_ref[...].astype(jnp.float32)          # (tr, 2, Wo, 2, C)
    m = jnp.maximum(x[:, 0], x[:, 1])           # (tr, Wo, 2, C)
    o_ref[...] = jnp.max(m, axis=2).astype(o_ref.dtype)


# ---------------------------------------------------------------------------
# Kernel wrappers
# ---------------------------------------------------------------------------

def fused_quant_matmul(a, w_kn, a_scale, act_half, *, quantize_input, cfg):
    """(M, K) activations (raw f32 or codes) @ (K, Np) weight codes -> raw f32
    code products.  Returns (y (Mp, Np), per-tile |y| column max, M)."""
    M, K = a.shape
    Kw, Np = w_kn.shape
    assert K == Kw, (K, Kw)

    if quantize_input:
        a = a.astype(jnp.float32)
        mxu_dtype = w_kn.dtype if act_half <= 256 else jnp.float32
        a_esz = 4
    else:
        mxu_dtype = a.dtype
        a_esz = a.dtype.itemsize
    w_esz = w_kn.dtype.itemsize

    tm = cfg['tm']
    tn = _largest_divisor(Np, (512, 256, 128))
    budget = cfg['budget']

    def step_bytes(tm_, tn_):
        return 2 * (tm_ * K * a_esz + K * tn_ * w_esz
                    + tm_ * tn_ * 4 + 8 * tn_ * 4)

    while step_bytes(tm, tn) > budget and tn > 128:
        tn //= 2
    while step_bytes(tm, tn) > budget and tm > 128:
        tm //= 2

    if M <= tm:
        tm = M
        Mp = M
    else:
        Mp = _round_up(M, tm)
        if Mp != M:
            a = jnp.pad(a, ((0, Mp - M), (0, 0)))   # zero rows are inert
    gm, gn = Mp // tm, Np // tn

    s = jnp.asarray(a_scale, jnp.float32)
    inv = jnp.where(s > 0, 1.0 / jnp.maximum(s, jnp.float32(1e-30)),
                    jnp.float32(1.0)).reshape(1)

    flops = 2 * Mp * K * Np
    bytes_accessed = (Mp * K * a_esz + gm * K * Np * w_esz
                      + Mp * Np * 4 + gm * 8 * Np * 4)

    y, colmax = pl.pallas_call(
        functools.partial(_fused_quant_matmul_kernel, half=float(act_half),
                          quantize_input=quantize_input, mxu_dtype=mxu_dtype),
        out_shape=(jax.ShapeDtypeStruct((Mp, Np), jnp.float32),
                   jax.ShapeDtypeStruct((gm * 8, Np), jnp.float32)),
        grid=(gm, gn),
        in_specs=[pl.BlockSpec((1,), lambda i, j: (0,),
                               memory_space=pltpu.MemorySpace.SMEM),
                  pl.BlockSpec((tm, K), lambda i, j: (i, 0)),
                  pl.BlockSpec((K, tn), lambda i, j: (0, j))],
        out_specs=(pl.BlockSpec((tm, tn), lambda i, j: (i, j)),
                   pl.BlockSpec((8, tn), lambda i, j: (i, j))),
        compiler_params=pltpu.CompilerParams(
            dimension_semantics=("parallel", "parallel"),
            vmem_limit_bytes=cfg['vmem_limit']),
        cost_estimate=pl.CostEstimate(flops=int(flops), transcendentals=0,
                                      bytes_accessed=int(bytes_accessed)),
    )(inv, a, w_kn)
    return y, colmax, M


def pallas_requant(y, r, half, relu, out_dtype, cfg):
    Mp, Np = y.shape
    tm = _largest_divisor(Mp, (1024, 512, 256, 128))
    esz = jnp.dtype(out_dtype).itemsize
    while tm > 128 and 2 * tm * Np * (4 + esz) > cfg['budget']:
        tm //= 2
    grid = Mp // tm
    r = jnp.asarray(r, jnp.float32).reshape(1)
    return pl.pallas_call(
        functools.partial(_requant_kernel, half=float(half), relu=relu),
        out_shape=jax.ShapeDtypeStruct((Mp, Np), out_dtype),
        grid=(grid,),
        in_specs=[pl.BlockSpec((1,), lambda i: (0,),
                               memory_space=pltpu.MemorySpace.SMEM),
                  pl.BlockSpec((tm, Np), lambda i: (i, 0))],
        out_specs=pl.BlockSpec((tm, Np), lambda i: (i, 0)),
        compiler_params=pltpu.CompilerParams(
            dimension_semantics=("parallel",),
            vmem_limit_bytes=cfg['vmem_limit']),
    )(r, y)


def pallas_requant_pool(y, r, half, relu, out_dtype, B, Hc, Wc, cfg):
    """Fused requant + ReLU + 2x2/stride-2 max pool.  y is the raw (M, Np)
    matmul output with M == B*Hc*Wc; returns (B, Hc/2, Wc/2, Np) codes."""
    M, Np = y.shape
    assert M == B * Hc * Wc
    Hp, Wp = Hc // 2, Wc // 2
    R = B * Hp
    # metadata-only reshape: dim1 = [even-row | odd-row] x Wp, lanes = 2 W-taps
    y_img = y.reshape(R, 2 * Wp, 2 * Np)
    tr = _largest_divisor(R, (256, 128, 64, 32, 16, 8, 4, 2, 1))
    esz = jnp.dtype(out_dtype).itemsize
    while tr > 1 and tr % 2 == 0 and \
            2 * (2 * tr * Wp * 2 * Np * 4 + tr * Wp * Np * esz) > cfg['budget']:
        tr //= 2
    grid = R // tr
    r = jnp.asarray(r, jnp.float32).reshape(1)
    out = pl.pallas_call(
        functools.partial(_requant_pool_kernel, half=float(half), relu=relu,
                          npad=Np),
        out_shape=jax.ShapeDtypeStruct((R, Wp, Np), out_dtype),
        grid=(grid,),
        in_specs=[pl.BlockSpec((1,), lambda i: (0,),
                               memory_space=pltpu.MemorySpace.SMEM),
                  pl.BlockSpec((tr, Wp, 2 * Np), lambda i: (i, 0, 0)),
                  pl.BlockSpec((tr, Wp, 2 * Np), lambda i: (i, 1, 0))],
        out_specs=pl.BlockSpec((tr, Wp, Np), lambda i: (i, 0, 0)),
        compiler_params=pltpu.CompilerParams(
            dimension_semantics=("parallel",),
            vmem_limit_bytes=cfg['vmem_limit']),
    )(r, y_img, y_img)
    return out.reshape(B, Hp, Wp, Np)


def pallas_relu(x, cfg):
    """Standalone ReLU (fallback — a ReLU after conv/fc is fused)."""
    n = x.size
    L = next((l for l in (1024, 512, 256, 128) if n % l == 0), x.shape[-1])
    x2 = x.reshape(n // L, L)
    rows = x2.shape[0]
    tr = _largest_divisor(rows, (1024, 512, 256, 128, 64, 32, 16, 8, 4, 2, 1))
    out = pl.pallas_call(
        _relu_kernel,
        out_shape=jax.ShapeDtypeStruct(x2.shape, x.dtype),
        grid=(rows // tr,),
        in_specs=[pl.BlockSpec((tr, L), lambda i: (i, 0))],
        out_specs=pl.BlockSpec((tr, L), lambda i: (i, 0)),
        compiler_params=pltpu.CompilerParams(
            dimension_semantics=("parallel",),
            vmem_limit_bytes=cfg['vmem_limit']),
    )(x2)
    return out.reshape(x.shape)


def pallas_maxpool2x2_nhwc(x, cfg):
    """Standalone 2x2/stride-2 max pool on NHWC codes (fallback — a pool after
    conv->relu is fused into the requant epilogue)."""
    B, H, W, C = x.shape
    assert H % 2 == 0 and W % 2 == 0, (H, W)
    Ho, Wo = H // 2, W // 2
    R = B * Ho
    xr = x.reshape(R, 2, Wo, 2, C)
    tr = _largest_divisor(R, (128, 64, 32, 16, 8, 4, 2, 1))
    out = pl.pallas_call(
        _maxpool_kernel,
        out_shape=jax.ShapeDtypeStruct((R, Wo, C), x.dtype),
        grid=(R // tr,),
        in_specs=[pl.BlockSpec((tr, 2, Wo, 2, C),
                               lambda i: (i, 0, 0, 0, 0))],
        out_specs=pl.BlockSpec((tr, Wo, C), lambda i: (i, 0, 0)),
        compiler_params=pltpu.CompilerParams(
            dimension_semantics=("parallel",),
            vmem_limit_bytes=cfg['vmem_limit']),
    )(xr)
    return out.reshape(B, Ho, Wo, C)


# ---------------------------------------------------------------------------
# Glue: im2col from NHWC (columns ordered (ki, kj, cin) to match the weight)
# ---------------------------------------------------------------------------

def im2col_nhwc(x, k, pad, stride=1):
    B, H, W, C = x.shape
    xp = jnp.pad(x, ((0, 0), (pad, pad), (pad, pad), (0, 0)))
    Ho = (H + 2 * pad - k) // stride + 1
    Wo = (W + 2 * pad - k) // stride + 1
    cols = []
    for di in range(k):
        for dj in range(k):
            cols.append(xp[:, di:di + (Ho - 1) * stride + 1:stride,
                           dj:dj + (Wo - 1) * stride + 1:stride, :])
    patches = jnp.stack(cols, axis=3)                  # (B, Ho, Wo, k*k, C)
    return patches.reshape(B * Ho * Wo, k * k * C), Ho, Wo


# ---------------------------------------------------------------------------
# NetworkGraph (JAX / Pallas re-implementation of MNSIM.Interface.network)
# ---------------------------------------------------------------------------

class NetworkGraph:
    def __init__(self, hardware_config, layer_config_list, quantize_config_list,
                 input_index_list, input_params, key):
        assert len(layer_config_list) == len(quantize_config_list)
        assert len(layer_config_list) == len(input_index_list)
        self.hardware_config = dict(hardware_config)
        self.layer_config_list = [dict(c) for c in layer_config_list]
        self.quantize_config_list = [dict(c) for c in quantize_config_list]
        self.input_index_list = [list(i) for i in input_index_list]
        self.input_params = dict(input_params)
        self._cfg = _chip_config()

        # Deterministic parameter init (Kaiming-ish scaling).
        self.params = {}
        for i, lc in enumerate(self.layer_config_list):
            if lc['type'] == 'conv':
                key, sub = jax.random.split(key)
                fan_in = lc['in_channels'] * lc['kernel_size'] ** 2
                self.params[i] = jax.random.normal(
                    sub, (lc['out_channels'], lc['in_channels'],
                          lc['kernel_size'], lc['kernel_size']),
                    jnp.float32) / jnp.sqrt(float(fan_in))
            elif lc['type'] == 'fc':
                key, sub = jax.random.split(key)
                self.params[i] = jax.random.normal(
                    sub, (lc['out_features'], lc['in_features']),
                    jnp.float32) / jnp.sqrt(float(lc['in_features']))

        self._prep_weights()

    # -- one-time weight prep: quantize to CODES, permute to NHWC order,
    #    transpose to (K, N), zero-pad N to a lane multiple, store as bf16.
    @staticmethod
    def _quantize_weight_codes(w2, bit):
        half = float(2 ** (bit - 1) - 1)
        amax = jnp.max(jnp.abs(w2))
        s = jnp.where(amax > 0, amax / half, jnp.float32(1.0))
        codes = jnp.clip(jnp.round(w2 / s), -half, half)
        return codes, s, half

    def _pack_weight(self, w2, weight_bit):
        codes, s_w, w_half = self._quantize_weight_codes(
            w2.astype(jnp.float32), weight_bit)
        dtype = jnp.bfloat16 if w_half <= 256 else jnp.float32
        n_real = codes.shape[0]
        w_kn = codes.T.astype(dtype)                        # (K, n_real)
        n_pad = _round_up(max(n_real, LANE), LANE)
        w_kn = jnp.pad(w_kn, ((0, 0), (0, n_pad - n_real)))
        return w_kn, n_real, s_w

    def _prep_weights(self):
        # NCHW shape inference (mirrors the PyTorch graph) so fc weights that
        # consume a `view` of a 4-D tensor can be permuted to NHWC order.
        shapes = [tuple(self.input_params['input_shape'])]
        srcs = [None]
        self.prepped = {}
        for i, lc in enumerate(self.layer_config_list):
            s_in = shapes[self.input_index_list[i][0] + i + 1]
            src_in = srcs[self.input_index_list[i][0] + i + 1]
            qc = self.quantize_config_list[i]
            if lc['type'] == 'conv':
                B, C, H, W = s_in
                k = lc['kernel_size']
                p = lc.get('padding', 0)
                st = lc.get('stride', 1)
                Ho = (H + 2 * p - k) // st + 1
                Wo = (W + 2 * p - k) // st + 1
                s_out, src_out = (B, lc['out_channels'], Ho, Wo), None
                w = self.params[i]                           # (Co,Ci,k,k)
                w2 = w.transpose(0, 2, 3, 1).reshape(w.shape[0], -1)
                self.prepped[i] = self._pack_weight(w2, qc['weight_bit'])
            elif lc['type'] == 'fc':
                s_out, src_out = (s_in[0], lc['out_features']), None
                w = self.params[i]                           # (out, in)
                if src_in is not None:
                    C, H, W = src_in
                    assert C * H * W == lc['in_features']
                    w = w.reshape(w.shape[0], C, H, W).transpose(0, 2, 3, 1)
                    w = w.reshape(w.shape[0], -1)            # (out, H*W*C)
                self.prepped[i] = self._pack_weight(w, qc['weight_bit'])
            elif lc['type'] == 'relu':
                s_out, src_out = s_in, src_in
            elif lc['type'] == 'pooling':
                B, C, H, W = s_in
                st = lc.get('stride', lc.get('kernel_size', 2))
                s_out, src_out = (B, C, H // st, W // st), None
            elif lc['type'] == 'view':
                s_out = (s_in[0], int(math.prod(s_in[1:])))
                src_out = tuple(s_in[1:]) if len(s_in) == 4 else src_in
            else:
                assert 0, f"not support {lc['type']}"
            shapes.append(s_out)
            srcs.append(src_out)

    # -- fusion legality checks (single consumer, immediate successor) -------
    def _fuse_relu_ok(self, i):
        n = len(self.layer_config_list)
        if i + 1 >= n or self.layer_config_list[i + 1]['type'] != 'relu':
            return False
        if self.input_index_list[i + 1] != [-1]:
            return False
        return all(self.input_index_list[j][0] + j + 1 != i + 1
                   for j in range(i + 2, n))

    def _fuse_pool_ok(self, i):
        n = len(self.layer_config_list)
        if i + 2 >= n:
            return False
        pc = self.layer_config_list[i + 2]
        if pc['type'] != 'pooling':
            return False
        if pc.get('kernel_size', 2) != 2:
            return False
        if pc.get('stride', pc.get('kernel_size', 2)) != 2:
            return False
        if self.input_index_list[i + 2] != [-1]:
            return False
        return all(self.input_index_list[j][0] + j + 1 != i + 2
                   for j in range(i + 3, n))

    # -- fused per-layer forward: [quantize(A)] -> matmul -> [relu/pool] ->
    #    requant, with the scale product folded into the epilogue ------------
    def _quantize_layer_forward(self, i, lc, qc, inp, inp_is_codes,
                                last_scale, last_bit, fuse_relu, fuse_pool):
        w_kn, n_real, s_w = self.prepped[i]
        cfg = self._cfg
        Bsz = Ho = Wo = None
        if lc['type'] == 'conv':
            xin = inp
            if xin.shape[-1] != lc['in_channels']:   # drop zero-padded lanes
                xin = xin[..., :lc['in_channels']]
            A, Ho, Wo = im2col_nhwc(xin, lc['kernel_size'],
                                    lc.get('padding', 0), lc.get('stride', 1))
            Bsz = inp.shape[0]
        else:
            A = inp
            if A.shape[-1] != w_kn.shape[0]:         # drop zero-padded lanes
                A = A[:, :w_kn.shape[0]]

        in_half = float(2 ** (last_bit - 1) - 1)
        out_half = float(2 ** (qc['activation_bit'] - 1) - 1)
        out_dtype = jnp.bfloat16 if out_half <= 256 else jnp.float32

        y, colmax, M = fused_quant_matmul(
            A, w_kn, last_scale, in_half,
            quantize_input=not inp_is_codes, cfg=cfg)

        # dynamic output scale (adc_action='SCALE'), computed on the raw code
        # products and converted to real units via the folded scale product.
        amax_raw = jnp.max(colmax)
        sprod = jnp.asarray(last_scale, jnp.float32) * s_w
        out_scale = jnp.where(amax_raw > 0, amax_raw * sprod / out_half,
                              jnp.float32(1.0))
        r = jnp.where(amax_raw > 0, out_half / amax_raw, jnp.float32(1.0))

        pooled = False
        if (lc['type'] == 'conv' and fuse_pool and y.shape[0] == M
                and Ho % 2 == 0 and Wo % 2 == 0 and (Wo // 2) % 8 == 0):
            out = pallas_requant_pool(y, r, out_half, True, out_dtype,
                                      Bsz, Ho, Wo, cfg)
            pooled = True
        else:
            yq = pallas_requant(y, r, out_half, fuse_relu, out_dtype, cfg)
            if yq.shape[0] != M:
                yq = yq[:M]
            out = (yq.reshape(Bsz, Ho, Wo, yq.shape[-1])
                   if lc['type'] == 'conv' else yq)
        return out, n_real, out_scale, pooled

    def forward(self, x, method='SINGLE_FIX_TEST', adc_action='SCALE'):
        cfg = self._cfg
        last_scale = jnp.float32(self.input_params['activation_scale'])
        last_bit = self.input_params['activation_bit']
        # External interface stays NCHW (PyTorch); convert once to NHWC so the
        # channel axis sits on the lane dimension for every kernel.
        if x.ndim == 4:
            cur = jnp.transpose(x, (0, 2, 3, 1)).astype(jnp.float32)
            c_real = x.shape[1]
        else:
            cur, c_real = x.astype(jnp.float32), x.shape[-1]
        # (tensor, real_channels_or_None, is_quantized_codes)
        tensor_list = [(cur, c_real, False)]
        skip = {}
        for i, lc in enumerate(self.layer_config_list):
            input_index = self.input_index_list[i]
            assert len(input_index) == 1
            inp, c_in, is_codes = tensor_list[input_index[0] + i + 1]
            qc = self.quantize_config_list[i]
            if skip.get(i, False):
                out, c_out, out_codes = inp, c_in, is_codes
            elif lc['type'] in ('conv', 'fc'):
                fuse_relu = self._fuse_relu_ok(i)
                fuse_pool = (lc['type'] == 'conv' and fuse_relu
                             and self._fuse_pool_ok(i))
                out, c_out, last_scale, pooled = self._quantize_layer_forward(
                    i, lc, qc, inp, is_codes, last_scale, last_bit,
                    fuse_relu, fuse_pool)
                last_bit = qc['activation_bit']
                out_codes = True
                if fuse_relu:
                    skip[i + 1] = True
                if pooled:
                    skip[i + 2] = True
            elif lc['type'] == 'relu':
                out, c_out, out_codes = pallas_relu(inp, cfg), c_in, is_codes
            elif lc['type'] == 'pooling':
                out, c_out, out_codes = (pallas_maxpool2x2_nhwc(inp, cfg),
                                         c_in, is_codes)
            elif lc['type'] == 'view':
                t = inp
                if t.ndim == 4 and t.shape[-1] != c_in:
                    t = t[..., :c_in]        # drop zero-padded channel lanes
                out, c_out, out_codes = (t.reshape(t.shape[0], -1), None,
                                         is_codes)
            else:
                assert 0, f"not support {lc['type']}"
            tensor_list.append((out, c_out, out_codes))

        final, c_fin, f_codes = tensor_list[-1]
        final = final.astype(jnp.float32)
        if f_codes:                          # dequantize codes -> real values
            final = final * jnp.asarray(last_scale, jnp.float32)
        if final.ndim == 4:                  # NHWC padded -> NCHW, real chans
            final = jnp.transpose(final[..., :c_fin], (0, 3, 1, 2))
        elif c_fin is not None and final.shape[-1] != c_fin:
            final = final[:, :c_fin]
        return final


# ---------------------------------------------------------------------------
# main
# ---------------------------------------------------------------------------

if __name__ == "__main__":
    key = jax.random.PRNGKey(0)
    key, kx = jax.random.split(key)

    B, Cin, H, W = 2, 4, 16, 16
    x = jax.random.normal(kx, (B, Cin, H, W), jnp.float32)

    hardware_config = {'xbar_size': 256, 'input_bit': 2,
                       'weight_bit': 1, 'quantize_bit': 10}
    layer_config_list = [
        {'type': 'conv', 'in_channels': 4, 'out_channels': 8,
         'kernel_size': 3, 'padding': 1, 'stride': 1},
        {'type': 'relu'},
        {'type': 'pooling', 'kernel_size': 2, 'stride': 2},
        {'type': 'view'},
        {'type': 'fc', 'in_features': 8 * 8 * 8, 'out_features': 10},
    ]
    quantize_config_list = [
        {'weight_bit': 9, 'activation_bit': 9, 'point_shift': -2}
        for _ in layer_config_list
    ]
    input_index_list = [[-1]] * len(layer_config_list)

    act_bit = 9
    act_scale = float(jnp.max(jnp.abs(x)) / (2 ** (act_bit - 1) - 1))
    input_params = {'activation_scale': act_scale,
                    'activation_bit': act_bit,
                    'input_shape': (B, Cin, H, W)}

    net = NetworkGraph(hardware_config, layer_config_list, quantize_config_list,
                       input_index_list, input_params, key)

    y = net.forward(x, method='SINGLE_FIX_TEST', adc_action='SCALE')
    jax.block_until_ready(y)
    assert y.shape == (B, 10), y.shape
    print("KERNEL_OK")
</pallas_src>

<mosaic_0001>
module attributes {stable_mosaic.version = 11 : i64} {
  func.func @_fused_quant_matmul_kernel(%arg0: i32, %arg1: i32, %arg2: memref<1xf32, #tpu.memory_space<smem>>, %arg3: memref<128x36xf32, #tpu.memory_space<vmem>>, %arg4: memref<36x128xbf16, #tpu.memory_space<vmem>>, %arg5: memref<128x128xf32, #tpu.memory_space<vmem>>, %arg6: memref<8x128xf32, #tpu.memory_space<vmem>>) attributes {dimension_semantics = [#tpu.dimension_semantics<parallel>, #tpu.dimension_semantics<parallel>], iteration_bounds = array<i64: 4, 1>, scalar_prefetch = 0 : i64, scratch_operands = 0 : i64, tpu.core_type = #tpu.core_type<tc>, window_params = [{transform_indices = @transform_0, window_bounds = array<i64: 1>}, {transform_indices = @transform_1, window_bounds = array<i64: 128, 36>}, {transform_indices = @transform_2, window_bounds = array<i64: 36, 128>}, {transform_indices = @transform_3, window_bounds = array<i64: 128, 128>}, {transform_indices = @transform_4, window_bounds = array<i64: 8, 128>}]} {
    %c0 = arith.constant 0 : index
    %c0_0 = arith.constant 0 : index
    %0 = vector.load %arg4[%c0, %c0_0] : memref<36x128xbf16, #tpu.memory_space<vmem>>, vector<36x128xbf16>
    %c0_1 = arith.constant 0 : index
    %1 = memref.load %arg2[%c0_1] : memref<1xf32, #tpu.memory_space<smem>>
    %c0_2 = arith.constant 0 : index
    %c0_3 = arith.constant 0 : index
    %2 = vector.load %arg3[%c0_2, %c0_3] : memref<128x36xf32, #tpu.memory_space<vmem>>, vector<128x36xf32>
    %3 = vector.broadcast %1 : f32 to vector<128x36xf32>
    %4 = arith.mulf %2, %3 : vector<128x36xf32>
    %5 = math.roundeven %4 : vector<128x36xf32>
    %cst = arith.constant -2.550000e+02 : f32
    %cst_4 = arith.constant 2.550000e+02 : f32
    %6 = vector.broadcast %cst : f32 to vector<128x36xf32>
    %7 = arith.maximumf %6, %5 : vector<128x36xf32>
    %8 = vector.broadcast %cst_4 : f32 to vector<128x36xf32>
    %9 = arith.minimumf %8, %7 : vector<128x36xf32>
    %10 = arith.truncf %9 : vector<128x36xf32> to vector<128x36xbf16>
    %cst_5 = arith.constant dense<0.000000e+00> : vector<128x128xf32>
    %11 = tpu.matmul %10, %0, %cst_5 {dimension_numbers = #tpu.dot_dimension_numbers<[1], [0], [0], [1], [0, 0, 1, 1], [], []>} : vector<128x36xbf16>, vector<36x128xbf16>, vector<128x128xf32> -> vector<128x128xf32>
    %c0_6 = arith.constant 0 : index
    %c0_7 = arith.constant 0 : index
    %12 = vector.load %arg5[%c0_6, %c0_7] : memref<128x128xf32, #tpu.memory_space<vmem>>, vector<128x128xf32>
    tpu.vector_store %arg5[%c0_6, %c0_7], %11 {strides = array<i32>} : memref<128x128xf32, #tpu.memory_space<vmem>>, vector<128x128xf32>,
    %13 = math.absf %11 : vector<128x128xf32>
    %cst_8 = arith.constant dense<0xFF800000> : vector<128xf32>
    %14 = vector.multi_reduction <maximumf>, %13, %cst_8 [0] : vector<128x128xf32> to vector<128xf32>
    %15 = vector.shape_cast %14 : vector<128xf32> to vector<1x128xf32>
    %16 = vector.shape_cast %15 : vector<1x128xf32> to vector<1x128xf32>
    %17 = vector.broadcast %16 : vector<1x128xf32> to vector<8x128xf32>
    %c0_9 = arith.constant 0 : index
    %c0_10 = arith.constant 0 : index
    %18 = vector.load %arg6[%c0_9, %c0_10] : memref<8x128xf32, #tpu.memory_space<vmem>>, vector<8x128xf32>
    tpu.vector_store %arg6[%c0_9, %c0_10], %17 {strides = array<i32>} : memref<8x128xf32, #tpu.memory_space<vmem>>, vector<8x128xf32>,
    return
  }
  func.func @transform_0(%arg0: i32, %arg1: i32) -> i32 {
    %c0_i32 = arith.constant 0 : i32
    %c0_i32_0 = arith.constant 0 : i32
    return %c0_i32 : i32
  }
  func.func @transform_1(%arg0: i32, %arg1: i32) -> (i32, i32) {
    %c0_i32 = arith.constant 0 : i32
    %c0_i32_0 = arith.constant 0 : i32
    return %arg0, %c0_i32 : i32, i32
  }
  func.func @transform_2(%arg0: i32, %arg1: i32) -> (i32, i32) {
    %c0_i32 = arith.constant 0 : i32
    %c0_i32_0 = arith.constant 0 : i32
    return %c0_i32, %arg1 : i32, i32
  }
  func.func @transform_3(%arg0: i32, %arg1: i32) -> (i32, i32) {
    %c0_i32 = arith.constant 0 : i32
    return %arg0, %arg1 : i32, i32
  }
  func.func @transform_4(%arg0: i32, %arg1: i32) -> (i32, i32) {
    %c0_i32 = arith.constant 0 : i32
    return %arg0, %arg1 : i32, i32
  }
}

</mosaic_0001>

<llo_original>
// kernel: tpu_custom_call.1
$region0: #{tpu_custom_call.1}
  #allocation0 [shape = 'u32[]', space=smem, size = 0x4, offset = 0x4, fixed_abs, tag = 'smem constant byte address 0x4 - core index']
  #allocation1 [shape = 'u32[72,128]{1,0:T(1,128)}', space=vmem, size = 0x9000, scoped, tag = 'internal scratch']
  #allocation2 [shape = 'f32[1]{0:T(128)S(6)}', space=smem, size = 0x200, scoped, tag = 'scoped memory for tpu_custom_call.1']
  %s0 = inlined_call_operand.<no memory space> [shape: f32[1], index: 0, kind: input, shape index: {}]
  %s1 = inlined_call_operand.vmem [shape: f32[512,36], index: 1, kind: input, shape index: {}]
  %s2 = inlined_call_operand.vmem [shape: bf16[36,128], index: 2, kind: input, shape index: {}]
  %s3 = inlined_call_operand.hbm [shape: f32[512,128], index: 3, kind: output, shape index: {0}]
  %s4 = inlined_call_operand.hbm [shape: f32[32,128], index: 4, kind: output, shape index: {1}]
  %5 = xla_tuple %s3, %s4
  %s6 = sld [smem:[#allocation0]]
  $region53: #{tpu_custom_call.1} parent=0
    _
  %s8 = ssub.s32 1, %s6
  %s9 = scalar_select 0, %s8, %s6
  %10 = sst [smem:[#allocation2]] %s0
  $region1: #{tpu_custom_call.1} parent=0
    #allocation3 [shape = 'u8[131072]{0}', space=vmem, size = 0x20000, scoped, tag = 'output window, operand 0']
    #allocation4 [shape = 's32[2]{0}', space=sflag, size = 0x8, scoped, tag = 'scoped memory for tpu_custom_call.1']
    #allocation5 [shape = 'u8[8192]{0}', space=vmem, size = 0x2000, scoped, tag = 'output window, operand 1']
    #allocation6 [shape = 's32[2]{0}', space=sflag, size = 0x8, scoped, tag = 'scoped memory for tpu_custom_call.1']
    %11 = vsyncpa [#allocation4], 0
    %s12 = scalar_lea.sflag [#allocation4], 1
    %13 = vsyncpa %s12, 0
    %14 = vsyncpa [#allocation6], 0
    %s15 = scalar_lea.sflag [#allocation6], 1
    %16 = vsyncpa %s15, 0
    loop: start=0, step=1, limit=6
    $region2: #{tpu_custom_call.1} parent=1 // loop_pre_header
      _
    $region3: #{tpu_custom_call.1} parent=1 // loop_header
      %s18 = sphi 0, %s22
      %p19 = scmp.ge.s32.totalorder %s18, 6
      %s25 = sphi 0, %s37
      %s26 = sphi 0, %s33
      %s27 = sphi 0, %s25
      %s28 = sphi 0, %s26
      %s29 = sphi 0, %s27
      %s30 = sphi 0, %s28
      %s38 = sphi 0, %s38
      %s40 = sphi 0, %s38
      %s41 = sphi 0, %s40
      %s55 = sphi 0, %s41
      %s61 = sphi 0, %s63
      %s64 = sphi 0, %s61
      %s65 = sphi 0, %s64
      %s81 = sphi 0, %s65
      %s87 = sphi 0, %s89
      %s90 = sphi 0, %s87
      %s91 = sphi 0, %s90
      %s107 = sphi 0, %s91
      %s115 = sphi 0, %s117
      %s118 = sphi 0, %s115
      %s119 = sphi 0, %s118
      %s135 = sphi 0, %s119
      %s143 = sphi 0, %s145
      %s146 = sphi 0, %s143
      %s147 = sphi 0, %s146
      %s163 = sphi 0, %s147
    $region4: #{tpu_custom_call.1} parent=1 // loop_header_branch
      %21 = sbr.rel (%p19) target = $region8
    $region5: #{tpu_custom_call.1} parent=1 // loop_body
      %s23 = ssub.s32 %s18, 1
      %s24 = ssub.s32 %s18, 2
      %s31 = sadd.s32 1, %s26
      %p32 = scmp.ge.s32.totalorder %s31, 1
      %s33 = scalar_select %p32, 0, %s31
      %s34 = sadd.s32 1, %s25
      %s35 = scalar_select %p32, %s34, %s25
      %p36 = scmp.ge.s32.totalorder %s35, 4
      %s37 = scalar_select %p36, 0, %s35
      %s39 = sadd.s32 %s38, 1
      %p42 = scmp.eq.s32.totalorder %s18, 3
      %p43 = scmp.ne.s32.totalorder %s38, %s40
      %p44 = scmp.eq.s32.totalorder %s18, 0
      %p45 = por %p43, %p44
      %p46 = scmp.ne.s32.totalorder %s38, %s40
      %p47 = scmp.eq.s32.totalorder %s23, 3
      %p48 = por %p46, %p47
      %p49 = scmp.ne.s32.totalorder %s40, %s41
      %p50 = scmp.eq.s32.totalorder %s23, 0
      %p51 = por %p49, %p50
      %p52 = scmp.ne.s32.totalorder %s40, %s41
      %p53 = scmp.eq.s32.totalorder %s24, 3
      %p54 = por %p52, %p53
      %p56 = scmp.ne.s32.totalorder %s41, %s55
      %p57 = scmp.eq.s32.totalorder %s24, 0
      %p58 = por %p56, %p57
      %s59 = ssub.s32 %s25, %s37
      %p60 = scmp.eq.s32.totalorder %s59, 0
      %s62 = sadd.s32 %s61, 1
      %s63 = scalar_select %p60, %s61, %s62
      %p66 = pneg %p60
      %p67 = scmp.eq.s32.totalorder %s18, 3
      %p68 = por %p66, %p67
      %p69 = scmp.ne.s32.totalorder %s61, %s64
      %p70 = scmp.eq.s32.totalorder %s18, 0
      %p71 = por %p69, %p70
      %p72 = scmp.ne.s32.totalorder %s61, %s64
      %p73 = scmp.eq.s32.totalorder %s23, 3
      %p74 = por %p72, %p73
      %p75 = scmp.ne.s32.totalorder %s64, %s65
      %p76 = scmp.eq.s32.totalorder %s23, 0
      %p77 = por %p75, %p76
      %p78 = scmp.ne.s32.totalorder %s64, %s65
      %p79 = scmp.eq.s32.totalorder %s24, 3
      %p80 = por %p78, %p79
      %p82 = scmp.ne.s32.totalorder %s65, %s81
      %p83 = scmp.eq.s32.totalorder %s24, 0
      %p84 = por %p82, %p83
      %s85 = ssub.s32 %s26, %s33
      %p86 = scmp.eq.s32.totalorder %s85, 0
      %s88 = sadd.s32 %s87, 1
      %s89 = scalar_select %p86, %s87, %s88
      %p92 = pneg %p86
      %p93 = scmp.eq.s32.totalorder %s18, 3
      %p94 = por %p92, %p93
      %p95 = scmp.ne.s32.totalorder %s87, %s90
      %p96 = scmp.eq.s32.totalorder %s18, 0
      %p97 = por %p95, %p96
      %p98 = scmp.ne.s32.totalorder %s87, %s90
      %p99 = scmp.eq.s32.totalorder %s23, 3
      %p100 = por %p98, %p99
      %p101 = scmp.ne.s32.totalorder %s90, %s91
      %p102 = scmp.eq.s32.totalorder %s23, 0
      %p103 = por %p101, %p102
      %p104 = scmp.ne.s32.totalorder %s90, %s91
      %p105 = scmp.eq.s32.totalorder %s24, 3
      %p106 = por %p104, %p105
      %p108 = scmp.ne.s32.totalorder %s91, %s107
      %p109 = scmp.eq.s32.totalorder %s24, 0
      %p110 = por %p108, %p109
      %s111 = ssub.s32 %s25, %s37
      %s112 = ssub.s32 %s26, %s33
      %s113 = sor.u32 %s111, %s112
      %p114 = scmp.eq.s32.totalorder %s113, 0
      %s116 = sadd.s32 %s115, 1
      %s117 = scalar_select %p114, %s115, %s116
      %p120 = pneg %p114
      %p121 = scmp.eq.s32.totalorder %s18, 3
      %p122 = por %p120, %p121
      %p123 = scmp.ne.s32.totalorder %s115, %s118
      %p124 = scmp.eq.s32.totalorder %s18, 0
      %p125 = por %p123, %p124
      %p126 = scmp.ne.s32.totalorder %s115, %s118
      %p127 = scmp.eq.s32.totalorder %s23, 3
      %p128 = por %p126, %p127
      %p129 = scmp.ne.s32.totalorder %s118, %s119
      %p130 = scmp.eq.s32.totalorder %s23, 0
      %p131 = por %p129, %p130
      %p132 = scmp.ne.s32.totalorder %s118, %s119
      %p133 = scmp.eq.s32.totalorder %s24, 3
      %p134 = por %p132, %p133
      %p136 = scmp.ne.s32.totalorder %s119, %s135
      %p137 = scmp.eq.s32.totalorder %s24, 0
      %p138 = por %p136, %p137
      %s139 = ssub.s32 %s25, %s37
      %s140 = ssub.s32 %s26, %s33
      %s141 = sor.u32 %s139, %s140
      %p142 = scmp.eq.s32.totalorder %s141, 0
      %s144 = sadd.s32 %s143, 1
      %s145 = scalar_select %p142, %s143, %s144
      %p148 = pneg %p142
      %p149 = scmp.eq.s32.totalorder %s18, 3
      %p150 = por %p148, %p149
      %p151 = scmp.ne.s32.totalorder %s143, %s146
      %p152 = scmp.eq.s32.totalorder %s18, 0
      %p153 = por %p151, %p152
      %p154 = scmp.ne.s32.totalorder %s143, %s146
      %p155 = scmp.eq.s32.totalorder %s23, 3
      %p156 = por %p154, %p155
      %p157 = scmp.ne.s32.totalorder %s146, %s147
      %p158 = scmp.eq.s32.totalorder %s23, 0
      %p159 = por %p157, %p158
      %p160 = scmp.ne.s32.totalorder %s146, %s147
      %p161 = scmp.eq.s32.totalorder %s24, 3
      %p162 = por %p160, %p161
      %p164 = scmp.ne.s32.totalorder %s147, %s163
      %p165 = scmp.eq.s32.totalorder %s24, 0
      %p166 = por %p164, %p165
      %p167 = scmp.le.s32.totalorder 1, %s18
      %p168 = scmp.lt.s32.totalorder %s18, 5
      %p169 = pnand %p167, %p168
      %p170 = pneg %p169
      // Predicated region
      $region9: #{tpu_custom_call.1} parent=5 // pred_check
        _
      $region10: #{tpu_custom_call.1} parent=5 // pred_check_branch
        %172 = sbr.rel (%p169) target = $region12
      $region11: #{tpu_custom_call.1} parent=5 // pred_region
        %s173 = ssub.s32 %s18, 1
        // Predicated region
        $region13: #{tpu_custom_call.1} parent=11 // pred_check
          %p174 = pneg %p51
        $region14: #{tpu_custom_call.1} parent=11 // pred_check_branch
          %176 = sbr.rel (%p174) target = $region16
        $region15: #{tpu_custom_call.1} parent=11 // pred_region
          _
        $region16: #{tpu_custom_call.1} parent=11 // pred_fallthru
          _
        // Predicated region
        $region17: #{tpu_custom_call.1} parent=11 // pred_check
          %p177 = pneg %p103
        $region18: #{tpu_custom_call.1} parent=11 // pred_check_branch
          %179 = sbr.rel (%p177) target = $region20
        $region19: #{tpu_custom_call.1} parent=11 // pred_region
          %p180 = scmp.lt.s32.totalorder %s28, 0
          %s181 = scalar_select %p180, %s28, 0
          %s182 = smul.addr %s181, 4
          %s183 = scalar_lea.vmem %s2, %s182
        $region20: #{tpu_custom_call.1} parent=11 // pred_fallthru
          _
      $region12: #{tpu_custom_call.1} parent=5 // pred_fallthru
        _
      %p184 = scmp.lt.s32.totalorder %s18, 4
      // Predicated region
      $region21: #{tpu_custom_call.1} parent=5 // pred_check
        %p185 = pneg %p184
      $region22: #{tpu_custom_call.1} parent=5 // pred_check_branch
        %187 = sbr.rel (%p185) target = $region24
      $region23: #{tpu_custom_call.1} parent=5 // pred_region
        // Predicated region
        $region25: #{tpu_custom_call.1} parent=23 // pred_check
          %p188 = pneg %p71
        $region26: #{tpu_custom_call.1} parent=23 // pred_check_branch
          %190 = sbr.rel (%p188) target = $region28
        $region27: #{tpu_custom_call.1} parent=23 // pred_region
          %s191 = smul.u32 16, %s25
          %p192 = scmp.lt.s32.totalorder %s191, 63
          %s193 = scalar_select %p192, %s191, 63
          %s194 = smul.addr %s193, 8
          %s195 = scalar_lea.vmem %s1, %s194
          %s196 = smul.u32 16, %s25
        $region28: #{tpu_custom_call.1} parent=23 // pred_fallthru
          _
      $region24: #{tpu_custom_call.1} parent=5 // pred_fallthru
        _
      %p197 = scmp.le.s32.totalorder 1, %s18
      %p198 = scmp.lt.s32.totalorder %s18, 5
      %p199 = pnand %p197, %p198
      %p200 = pneg %p199
      // Predicated region
      $region29: #{tpu_custom_call.1} parent=5 // pred_check
        _
      $region30: #{tpu_custom_call.1} parent=5 // pred_check_branch
        %202 = sbr.rel (%p199) target = $region32
      $region31: #{tpu_custom_call.1} parent=5 // pred_region
        %s203 = ssub.s32 %s18, 1
        %p204 = pneg %p51
        %p205 = pneg %p48
        %s206 = smul.u32 16, %s27
        %p207 = scmp.lt.s32.totalorder %s206, 63
        %s208 = scalar_select %p207, %s206, 63
        %s209 = smul.addr %s208, 8
        %s210 = scalar_lea.vmem %s1, %s209
        %p211 = pneg %p77
        %p212 = pneg %p74
        %p213 = scmp.lt.s32.totalorder %s28, 0
        %s214 = scalar_select %p213, %s28, 0
        %s215 = smul.addr %s214, 4
        %s216 = scalar_lea.vmem %s2, %s215
        %p217 = pneg %p103
        %p218 = pneg %p100
        %p219 = pneg %p131
        %p220 = pneg %p128
        %s221 = sand.u32 %s118, 1
        %s222 = scalar_lea.sflag [#allocation4], %s221
        %s223 = sand.u32 %s118, 1
        %s224 = smul.addr %s223, 128
        %s225 = scalar_lea.vmem [#allocation3], %s224
        %p226 = pneg %p159
        %p227 = pneg %p156
        %s228 = sand.u32 %s146, 1
        %s229 = scalar_lea.sflag [#allocation6], %s228
        %s230 = sand.u32 %s146, 1
        %s231 = smul.addr %s230, 8
        %s232 = scalar_lea.vmem [#allocation5], %s231
        %s233 = smul.u32 16, %s27
        %p234 = scmp.lt.s32.totalorder %s233, 63
        %s235 = scalar_select %p234, %s233, 63
        %s236 = smul.addr %s235, 8
        %s237 = scalar_lea.vmem %s1, %s236
        %s238 = smul.u32 16, %s27
        %p239 = scmp.lt.s32.totalorder %s28, 0
        %s240 = scalar_select %p239, %s28, 0
        %s241 = smul.addr %s240, 4
        %s242 = scalar_lea.vmem %s2, %s241
        %s243 = smul.u32 16, %s27
        %v245 = vld [vmem:[%s242] sm:$0xf]
        %v246 = vld [vmem:[%s242 + $0x4] sm:$0xf]
        %v247 = vld [vmem:[%s242 + $0x8] sm:$0xf]
        %v248 = vld [vmem:[%s242 + $0xc] sm:$0xf]
        %v249 = vld [vmem:[%s242 + $0x10] sm:$0x3]
        %s250 = sld [smem:[#allocation2]]
        %v251 = vld [vmem:[%s237] sm:$0xff]
        %v252 = vld [vmem:[%s237 + $0x8] sm:$0xff]
        %v253 = vld [vmem:[%s237 + $0x10] sm:$0xff]
        %v254 = vld [vmem:[%s237 + $0x18] sm:$0xff]
        %v255 = vld [vmem:[%s237 + $0x20] sm:$0xff]
        %v256 = vld [vmem:[%s237 + $0x28] sm:$0xff]
        %v257 = vld [vmem:[%s237 + $0x30] sm:$0xff]
        %v258 = vld [vmem:[%s237 + $0x38] sm:$0xff]
        %v259 = vld [vmem:[%s237 + $0x40] sm:$0xff]
        %v260 = vld [vmem:[%s237 + $0x48] sm:$0xff]
        %v261 = vld [vmem:[%s237 + $0x50] sm:$0xff]
        %v262 = vld [vmem:[%s237 + $0x58] sm:$0xff]
        %v263 = vld [vmem:[%s237 + $0x60] sm:$0xff]
        %v264 = vld [vmem:[%s237 + $0x68] sm:$0xff]
        %v265 = vld [vmem:[%s237 + $0x70] sm:$0xff]
        %v266 = vld [vmem:[%s237 + $0x78] sm:$0xff]
        %v267 = vstv %s250
        %v268 = vmul.f32 %v251, %v267
        %v269 = vmul.f32 %v252, %v267
        %v270 = vmul.f32 %v253, %v267
        %v271 = vmul.f32 %v254, %v267
        %v272 = vmul.f32 %v255, %v267
        %v273 = vmul.f32 %v256, %v267
        %v274 = vmul.f32 %v257, %v267
        %v275 = vmul.f32 %v258, %v267
        %v276 = vmul.f32 %v259, %v267
        %v277 = vmul.f32 %v260, %v267
        %v278 = vmul.f32 %v261, %v267
        %v279 = vmul.f32 %v262, %v267
        %v280 = vmul.f32 %v263, %v267
        %v281 = vmul.f32 %v264, %v267
        %v282 = vmul.f32 %v265, %v267
        %v283 = vmul.f32 %v266, %v267
        %v284 = vround.ne.pseudo %v268
        %v285 = vround.ne.pseudo %v269
        %v286 = vround.ne.pseudo %v270
        %v287 = vround.ne.pseudo %v271
        %v288 = vround.ne.pseudo %v272
        %v289 = vround.ne.pseudo %v273
        %v290 = vround.ne.pseudo %v274
        %v291 = vround.ne.pseudo %v275
        %v292 = vround.ne.pseudo %v276
        %v293 = vround.ne.pseudo %v277
        %v294 = vround.ne.pseudo %v278
        %v295 = vround.ne.pseudo %v279
        %v296 = vround.ne.pseudo %v280
        %v297 = vround.ne.pseudo %v281
        %v298 = vround.ne.pseudo %v282
        %v299 = vround.ne.pseudo %v283
        %v300 = vmax.f32 %v284, -255.0
        %v301 = vmax.f32 %v285, -255.0
        %v302 = vmax.f32 %v286, -255.0
        %v303 = vmax.f32 %v287, -255.0
        %v304 = vmax.f32 %v288, -255.0
        %v305 = vmax.f32 %v289, -255.0
        %v306 = vmax.f32 %v290, -255.0
        %v307 = vmax.f32 %v291, -255.0
        %v308 = vmax.f32 %v292, -255.0
        %v309 = vmax.f32 %v293, -255.0
        %v310 = vmax.f32 %v294, -255.0
        %v311 = vmax.f32 %v295, -255.0
        %v312 = vmax.f32 %v296, -255.0
        %v313 = vmax.f32 %v297, -255.0
        %v314 = vmax.f32 %v298, -255.0
        %v315 = vmax.f32 %v299, -255.0
        %v316 = vmin.f32 %v300, 255.0
        %v317 = vmin.f32 %v301, 255.0
        %v318 = vmin.f32 %v302, 255.0
        %v319 = vmin.f32 %v303, 255.0
        %v320 = vmin.f32 %v304, 255.0
        %v321 = vmin.f32 %v305, 255.0
        %v322 = vmin.f32 %v306, 255.0
        %v323 = vmin.f32 %v307, 255.0
        %v324 = vmin.f32 %v308, 255.0
        %v325 = vmin.f32 %v309, 255.0
        %v326 = vmin.f32 %v310, 255.0
        %v327 = vmin.f32 %v311, 255.0
        %v328 = vmin.f32 %v312, 255.0
        %v329 = vmin.f32 %v313, 255.0
        %v330 = vmin.f32 %v314, 255.0
        %v331 = vmin.f32 %v315, 255.0
        %v332 = vpack.c.bf16 %v317, %v316
        %v333 = vpack.c.bf16 %v319, %v318
        %v334 = vpack.c.bf16 %v321, %v320
        %v335 = vpack.c.bf16 %v323, %v322
        %v336 = vpack.c.bf16 %v325, %v324
        %v337 = vpack.c.bf16 %v327, %v326
        %v338 = vpack.c.bf16 %v329, %v328
        %v339 = vpack.c.bf16 %v331, %v330
        %v345 = vunpack.c.l.b16 %v245
        %v346 = vunpack.c.l.b16 %v246
        %v347 = vunpack.c.l.b16 %v247
        %v348 = vunpack.c.l.b16 %v248
        %v349 = vunpack.c.l.b16 %v249
        %v350 = vpack.c.b16 %v346, %v345
        %v351 = vpack.c.b16 %v348, %v347
        %v352 = vpack.c.b16 %v349, %v349
        %vm355 = vcmask 293888
        %v357 = vsel %vm355, %v332, 0
        %v360 = vsel %vm355, %v333, 0
        %v363 = vsel %vm355, %v334, 0
        %v366 = vsel %vm355, %v335, 0
        %v369 = vsel %vm355, %v336, 0
        %v372 = vsel %vm355, %v337, 0
        %v375 = vsel %vm355, %v338, 0
        %v378 = vsel %vm355, %v339, 0
        %vm380 = vcmask 1041408
        %v382 = vsel %vm380, %v352, 0
        %384 = vmatpush.bf16.msra.mxu0 0
        %385 = vmatpush.bf16.msra.mxu0 0
        %386 = vmatpush.bf16.msra.mxu0 0
        %387 = vmatpush.bf16.msra.mxu0 0
        %388 = vmatpush.bf16.msra.mxu0 0
        %389 = vmatpush.bf16.msra.mxu0 %v382
        %390 = vmatpush.bf16.msra.mxu0 %v351
        %391 = vmatpush.bf16.msra.mxu0 %v350
        %392 = vmatmul.bf16.gmra.mxu0 %v357
        %v393 = vpop.f32.mrf.mxu0
        %v394 = vadd.f32 0.0, %v393
        %v395 = vpop.f32.mrf.mxu0
        %v396 = vadd.f32 0.0, %v395
        %397 = vmatmul.bf16.gmra.mxu0 %v360
        %v398 = vpop.f32.mrf.mxu0
        %v399 = vadd.f32 0.0, %v398
        %v400 = vpop.f32.mrf.mxu0
        %v401 = vadd.f32 0.0, %v400
        %402 = vmatmul.bf16.gmra.mxu0 %v363
        %v403 = vpop.f32.mrf.mxu0
        %v404 = vadd.f32 0.0, %v403
        %v405 = vpop.f32.mrf.mxu0
        %v406 = vadd.f32 0.0, %v405
        %407 = vmatmul.bf16.gmra.mxu0 %v366
        %v408 = vpop.f32.mrf.mxu0
        %v409 = vadd.f32 0.0, %v408
        %v410 = vpop.f32.mrf.mxu0
        %v411 = vadd.f32 0.0, %v410
        %412 = vmatmul.bf16.gmra.mxu0 %v369
        %v413 = vpop.f32.mrf.mxu0
        %v414 = vadd.f32 0.0, %v413
        %v415 = vpop.f32.mrf.mxu0
        %v416 = vadd.f32 0.0, %v415
        %417 = vmatmul.bf16.gmra.mxu0 %v372
        %v418 = vpop.f32.mrf.mxu0
        %v419 = vadd.f32 0.0, %v418
        %v420 = vpop.f32.mrf.mxu0
        %v421 = vadd.f32 0.0, %v420
        %422 = vmatmul.bf16.gmra.mxu0 %v375
        %v423 = vpop.f32.mrf.mxu0
        %v424 = vadd.f32 0.0, %v423
        %v425 = vpop.f32.mrf.mxu0
        %v426 = vadd.f32 0.0, %v425
        %427 = vmatmul.bf16.gmra.mxu0 %v378
        %v428 = vpop.f32.mrf.mxu0
        %v429 = vadd.f32 0.0, %v428
        %v430 = vpop.f32.mrf.mxu0
        %v431 = vadd.f32 0.0, %v430
        %432 = vdwg.mxu0
        %433 = vst [vmem:[%s225] sm:$0xff] %v394
        %434 = vst [vmem:[%s225 + $0x8] sm:$0xff] %v396
        %435 = vst [vmem:[%s225 + $0x10] sm:$0xff] %v399
        %436 = vst [vmem:[%s225 + $0x18] sm:$0xff] %v401
        %437 = vst [vmem:[%s225 + $0x20] sm:$0xff] %v404
        %438 = vst [vmem:[%s225 + $0x28] sm:$0xff] %v406
        %439 = vst [vmem:[%s225 + $0x30] sm:$0xff] %v409
        %440 = vst [vmem:[%s225 + $0x38] sm:$0xff] %v411
        %441 = vst [vmem:[%s225 + $0x40] sm:$0xff] %v414
        %442 = vst [vmem:[%s225 + $0x48] sm:$0xff] %v416
        %443 = vst [vmem:[%s225 + $0x50] sm:$0xff] %v419
        %444 = vst [vmem:[%s225 + $0x58] sm:$0xff] %v421
        %445 = vst [vmem:[%s225 + $0x60] sm:$0xff] %v424
        %446 = vst [vmem:[%s225 + $0x68] sm:$0xff] %v426
        %447 = vst [vmem:[%s225 + $0x70] sm:$0xff] %v429
        %448 = vst [vmem:[%s225 + $0x78] sm:$0xff] %v431
        %v449 = vand.u32 2147483647, %v394
        %v450 = vand.u32 2147483647, %v396
        %v451 = vand.u32 2147483647, %v399
        %v452 = vand.u32 2147483647, %v401
        %v453 = vand.u32 2147483647, %v404
        %v454 = vand.u32 2147483647, %v406
        %v455 = vand.u32 2147483647, %v409
        %v456 = vand.u32 2147483647, %v411
        %v457 = vand.u32 2147483647, %v414
        %v458 = vand.u32 2147483647, %v416
        %v459 = vand.u32 2147483647, %v419
        %v460 = vand.u32 2147483647, %v421
        %v461 = vand.u32 2147483647, %v424
        %v462 = vand.u32 2147483647, %v426
        %v463 = vand.u32 2147483647, %v429
        %v464 = vand.u32 2147483647, %v431
        %v465 = vmax.f32 %v449, %v453
        %v466 = vmax.f32 %v450, %v454
        %v467 = vmax.f32 %v451, %v455
        %v468 = vmax.f32 %v452, %v456
        %v469 = vmax.f32 %v465, %v457
        %v470 = vmax.f32 %v466, %v458
        %v471 = vmax.f32 %v467, %v459
        %v472 = vmax.f32 %v468, %v460
        %v473 = vmax.f32 %v469, %v461
        %v474 = vmax.f32 %v470, %v462
        %v475 = vmax.f32 %v471, %v463
        %v476 = vmax.f32 %v472, %v464
        %v477 = vmax.f32 %v473, %v474
        %v478 = vmax.f32 %v475, %v476
        %v479 = vmax.f32 %v477, %v478
        %v480 = vrot.slane %v479, 4
        %v481 = vmax.f32 %v479, %v480
        %v482 = vrot.slane %v481, 2
        %v483 = vmax.f32 %v481, %v482
        %v484 = vrot.slane %v483, 1
        %v485 = vmax.f32 %v483, %v484
        %486 = vst [vmem:[%s232] sm:$0xff] %v485
        %s487 = sand.u32 %s118, 1
        %s488 = scalar_lea.sflag [#allocation4], %s487
        %s489 = sand.u32 %s118, 1
        %s490 = smul.addr %s489, 128
        %s491 = scalar_lea.vmem [#allocation3], %s490
        %s492 = sand.u32 %s146, 1
        %s493 = scalar_lea.sflag [#allocation6], %s492
        %s494 = sand.u32 %s146, 1
        %s495 = smul.addr %s494, 8
        %s496 = scalar_lea.vmem [#allocation5], %s495
        // Predicated region
        $region33: #{tpu_custom_call.1} parent=31 // pred_check
          %p497 = pneg %p128
        $region34: #{tpu_custom_call.1} parent=31 // pred_check_branch
          %499 = sbr.rel (%p497) target = $region36
        $region35: #{tpu_custom_call.1} parent=31 // pred_region
          %s500 = smul.u32 16, %s27
          %502 = vsyncadd %s488, 0
          %s503 = sadd.s32 %s28, %s500
          %s504 = smul.addr %s503, 8
          %s505 = scalar_lea.hbm %s3, %s504
          %s506 = sshll.u32 %s491, 4
          %s507 = int_to_ptr.vmem [resolvable:$true] %s506
          %s508 = sshll.u32 %s505, 4
          %s509 = int_to_ptr.hbm [resolvable:$true] %s508
          %514 = dma.vmem_to_hbm [thread:$0]  %s507, 2048, %s509, %s488, 128, 128, 8
        $region36: #{tpu_custom_call.1} parent=31 // pred_fallthru
          _
        // Predicated region
        $region37: #{tpu_custom_call.1} parent=31 // pred_check
          %p515 = pneg %p156
        $region38: #{tpu_custom_call.1} parent=31 // pred_check_branch
          %517 = sbr.rel (%p515) target = $region40
        $region39: #{tpu_custom_call.1} parent=31 // pred_region
          %519 = vsyncadd %s493, 0
          %s520 = sadd.s32 %s28, %s27
          %s521 = smul.addr %s520, 8
          %s522 = scalar_lea.hbm %s4, %s521
          %s524 = sshll.u32 %s496, 4
          %s525 = int_to_ptr.vmem [resolvable:$true] %s524
          %s526 = sshll.u32 %s522, 4
          %s527 = int_to_ptr.hbm [resolvable:$true] %s526
          %529 = dma.vmem_to_hbm [thread:$0]  %s525, 128, %s527, %s493
        $region40: #{tpu_custom_call.1} parent=31 // pred_fallthru
          _
      $region32: #{tpu_custom_call.1} parent=5 // pred_fallthru
        _
      %p530 = scmp.le.s32.totalorder 2, %s18
      // Predicated region
      $region41: #{tpu_custom_call.1} parent=5 // pred_check
        %p531 = pneg %p530
      $region42: #{tpu_custom_call.1} parent=5 // pred_check_branch
        %533 = sbr.rel (%p531) target = $region44
      $region43: #{tpu_custom_call.1} parent=5 // pred_region
        %s534 = ssub.s32 %s18, 2
        // Predicated region
        $region45: #{tpu_custom_call.1} parent=43 // pred_check
          %p535 = pneg %p134
        $region46: #{tpu_custom_call.1} parent=43 // pred_check_branch
          %537 = sbr.rel (%p535) target = $region48
        $region47: #{tpu_custom_call.1} parent=43 // pred_region
          %s538 = sand.u32 %s119, 1
          %s539 = scalar_lea.sflag [#allocation4], %s538
          %s540 = sand.u32 %s119, 1
          %s541 = smul.addr %s540, 128
          %s542 = scalar_lea.vmem [#allocation3], %s541
          %544 = dma.done %s539, 2048
        $region48: #{tpu_custom_call.1} parent=43 // pred_fallthru
          _
        // Predicated region
        $region49: #{tpu_custom_call.1} parent=43 // pred_check
          %p545 = pneg %p162
        $region50: #{tpu_custom_call.1} parent=43 // pred_check_branch
          %547 = sbr.rel (%p545) target = $region52
        $region51: #{tpu_custom_call.1} parent=43 // pred_region
          %s548 = sand.u32 %s147, 1
          %s549 = scalar_lea.sflag [#allocation6], %s548
          %s550 = sand.u32 %s147, 1
          %s551 = smul.addr %s550, 8
          %s552 = scalar_lea.vmem [#allocation5], %s551
          %554 = dma.done %s549, 128
        $region52: #{tpu_custom_call.1} parent=43 // pred_fallthru
          _
      $region44: #{tpu_custom_call.1} parent=5 // pred_fallthru
        _
    $region6: #{tpu_custom_call.1} parent=1 // loop_footer
      %s22 = sadd.s32 1, %s18
    $region7: #{tpu_custom_call.1} parent=1 // loop_footer_branch
      %17 = sbr.rel target = $region3
    $region8: #{tpu_custom_call.1} parent=1 // loop_exit
      _
    %555 = vsyncpa [#allocation4], 1
    %s556 = scalar_lea.sflag [#allocation4], 1
    %557 = vsyncpa %s556, 1
    %558 = vsyncpa [#allocation6], 1
    %s559 = scalar_lea.sflag [#allocation6], 1
    %560 = vsyncpa %s559, 1

</llo_original>
